<compile_context>
chip_gen: v6e
topology: v6e:2x2x1
jax: 0.10.0
libtpu: 0.0.40
codegen_flags: <defaults>
</compile_context>

<pallas_src>
import functools

import jax
import jax.numpy as jnp
from jax import lax
from jax.experimental import pallas as pl
from jax.experimental.pallas import tpu as pltpu

F32 = jnp.float32
BF16 = jnp.bfloat16


# ---------------------------------------------------------------------------
# math helpers (shared by the Pallas kernels and the pure-JAX reference)
# ---------------------------------------------------------------------------
def _gelu_tanh(v):
    # TODO(synk): tanh-approx GELU; PyTorch F.gelu default is the exact erf form.
    c = 0.7978845608028654  # sqrt(2/pi)
    return 0.5 * v * (1.0 + jnp.tanh(c * (v + 0.044715 * v * v * v)))


def _layernorm(v, g, b, eps=1e-5):
    m = jnp.mean(v, axis=-1, keepdims=True)
    c = v - m
    var = jnp.mean(c * c, axis=-1, keepdims=True)
    return c * lax.rsqrt(var + eps) * g + b


def _dot_bf16(a, w):
    # bf16 x bf16 on the MXU, f32 accumulation.
    return jnp.dot(a.astype(BF16), w, preferred_element_type=F32)


def _conv_taps(a0, a1, a2, w3, bias):
    """3-tap conv as matmuls: a_j (rows, Cin), w3 (3, Cin, D) bf16, bias (1, D)."""
    return (_dot_bf16(a0, w3[0]) + _dot_bf16(a1, w3[1])
            + _dot_bf16(a2, w3[2]) + bias)


# ---------------------------------------------------------------------------
# Kernel 1: conv frontend (conv1 + gelu + conv2(stride 2) + gelu + pos-emb add)
# ---------------------------------------------------------------------------
def _frontend_kernel(xe_ref, xo_ref, pos_ref, c1w_ref, c1b_ref, c2w_ref, c2b_ref,
                     o_ref, *, seq_out):
    t = seq_out
    xe = xe_ref[...]                      # (T+1, Cin) bf16, even phase of padded x
    xo = xo_ref[...]                      # (T+1, Cin) bf16, odd phase
    c1w = c1w_ref[...]                    # (3, Cin, D) bf16
    c1b = c1b_ref[...]                    # (1, D) f32
    c2w = c2w_ref[...]                    # (3, D, D) bf16
    c2b = c2b_ref[...]                    # (1, D) f32

    # conv1 (stride 1) evaluated separately at even / odd output positions.
    h_even = _gelu_tanh(_conv_taps(xe[0:t], xo[0:t], xe[1:t + 1], c1w, c1b))
    h_odd = _gelu_tanh(_conv_taps(xo[0:t], xe[1:t + 1], xo[1:t + 1], c1w, c1b))

    # conv1 output at row 2t-1 == h_odd shifted down by one row, zero at row 0.
    # Built in registers (no VMEM scratch round-trip).
    h_odd_prev = jnp.concatenate(
        [jnp.zeros((1, h_odd.shape[1]), F32), h_odd[:t - 1]], axis=0)

    # conv2 (stride 2) + GELU + positional embedding.
    g = _gelu_tanh(_conv_taps(h_odd_prev, h_even, h_odd, c2w, c2b))
    o_ref[...] = g + pos_ref[...]


def _frontend(xe, xo, pos, c1w, c1b, c2w, c2b):
    b, tp1, cin = xe.shape
    t = tp1 - 1
    d = pos.shape[-1]
    kern = functools.partial(_frontend_kernel, seq_out=t)
    return pl.pallas_call(
        kern,
        out_shape=jax.ShapeDtypeStruct((b, t, d), F32),
        grid=(b,),
        in_specs=[
            pl.BlockSpec((pl.Squeezed(), tp1, cin), lambda i: (i, 0, 0)),
            pl.BlockSpec((pl.Squeezed(), tp1, cin), lambda i: (i, 0, 0)),
            pl.BlockSpec((t, d), lambda i: (0, 0)),
            pl.BlockSpec((3, cin, d), lambda i: (0, 0, 0)),
            pl.BlockSpec((1, d), lambda i: (0, 0)),
            pl.BlockSpec((3, d, d), lambda i: (0, 0, 0)),
            pl.BlockSpec((1, d), lambda i: (0, 0)),
        ],
        out_specs=pl.BlockSpec((pl.Squeezed(), t, d), lambda i: (i, 0, 0)),
        compiler_params=pltpu.CompilerParams(
            dimension_semantics=("parallel",),
            vmem_limit_bytes=64 * 1024 * 1024),
    )(xe, xo, pos, c1w, c1b, c2w, c2b)


# ---------------------------------------------------------------------------
# Kernel 2: all transformer blocks + ln_post fused, grid = (batch, layer)
# ---------------------------------------------------------------------------
def _blocks_kernel(x0_ref, lnpg_ref, lnpb_ref,
                   ln1g_ref, ln1b_ref, wq_ref, bq_ref, wk_ref, bk_ref,
                   wv_ref, bv_ref, wo_ref, bo_ref,
                   ln2g_ref, ln2b_ref, w1_ref, b1_ref, w2_ref, b2_ref,
                   o_ref, *, n_heads, n_layers, q_tile, mlp_tile):
    layer = pl.program_id(1)
    t, d = o_ref.shape
    dh = d // n_heads
    mlp = w1_ref.shape[-1]
    nq = t // q_tile
    nm = mlp // mlp_tile
    scale = dh ** -0.5

    # Layer 0: seed the VMEM-resident activation from the frontend output.
    # TODO(synk): output blocks are not preloaded from HBM, so input_output
    # aliasing alone cannot replace this copy; x0's block stays pinned in VMEM.
    @pl.when(layer == 0)
    def _seed():
        o_ref[...] = x0_ref[...]

    # ---------------- residual self-attention (pre-LN) ----------------
    g1 = ln1g_ref[...]
    b1g = ln1b_ref[...]

    x_full = o_ref[...]                                      # (T, D) f32
    xn_full = _layernorm(x_full, g1, b1g).astype(BF16)       # bf16 once, reused

    # Full-width K/V projections (best MXU N), bf16-resident for the q loop.
    k_full = (jnp.dot(xn_full, wk_ref[...], preferred_element_type=F32)
              + bk_ref[...]).astype(BF16)                     # (T, D) bf16
    v_full = (jnp.dot(xn_full, wv_ref[...], preferred_element_type=F32)
              + bv_ref[...]).astype(BF16)
    kh = [k_full[:, h * dh:(h + 1) * dh] for h in range(n_heads)]
    vh = [v_full[:, h * dh:(h + 1) * dh] for h in range(n_heads)]

    wq_v = wq_ref[...]
    bq_v = bq_ref[...]
    bo_v = bo_ref[...]

    # Query-tiled attention: only a (Tq, T) score block is live per head.
    @pl.loop(0, nq)
    def _attn_tile(qi):
        r0 = pl.multiple_of(qi * q_tile, q_tile)
        x_t = o_ref[pl.ds(r0, q_tile), :]                     # (Tq, D) f32
        xn_t = _layernorm(x_t, g1, b1g).astype(BF16)
        q_t = jnp.dot(xn_t, wq_v, preferred_element_type=F32) + bq_v  # (Tq, D)

        acc = jnp.zeros((q_tile, d), F32)
        for h in range(n_heads):                              # static head unroll
            qh = q_t[:, h * dh:(h + 1) * dh].astype(BF16)     # (Tq, dh)
            s = lax.dot_general(qh, kh[h], (((1,), (1,)), ((), ())),
                                preferred_element_type=F32) * scale   # (Tq, T)
            s = s - jnp.max(s, axis=-1, keepdims=True)
            p = jnp.exp(s)
            p = p * pl.reciprocal(jnp.sum(p, axis=-1, keepdims=True), approx=True)
            oh = jnp.dot(p.astype(BF16), vh[h],
                         preferred_element_type=F32)          # (Tq, dh)
            # accumulate this head's output-projection partial into (Tq, D)
            acc = acc + jnp.dot(oh.astype(BF16),
                                wo_ref[h * dh:(h + 1) * dh, :],
                                preferred_element_type=F32)
        o_ref[pl.ds(r0, q_tile), :] = x_t + acc + bo_v        # residual add

    # ---------------- residual MLP (pre-LN), hidden-dim tiled ----------------
    x2 = o_ref[...]                                           # post-attention
    xn2 = _layernorm(x2, ln2g_ref[...], ln2b_ref[...]).astype(BF16)

    def mlp_step(j, acc):
        c0 = pl.multiple_of(j * mlp_tile, mlp_tile)
        w1_t = w1_ref[:, pl.ds(c0, mlp_tile)]                 # (D, mt) bf16
        b1_t = b1_ref[:, pl.ds(c0, mlp_tile)]                 # (1, mt) f32
        hid = _gelu_tanh(jnp.dot(xn2, w1_t, preferred_element_type=F32) + b1_t)
        w2_t = w2_ref[pl.ds(c0, mlp_tile), :]                 # (mt, D) bf16
        return acc + jnp.dot(hid.astype(BF16), w2_t, preferred_element_type=F32)

    mlp_out = lax.fori_loop(0, nm, mlp_step, jnp.zeros((t, d), F32))
    x3 = x2 + mlp_out + b2_ref[...]

    @pl.when(layer < n_layers - 1)
    def _store():
        o_ref[...] = x3

    @pl.when(layer == n_layers - 1)
    def _finalize():
        o_ref[...] = _layernorm(x3, lnpg_ref[...], lnpb_ref[...])


def _transformer(x0, lnp_g, lnp_b, blk, n_heads):
    b, t, d = x0.shape
    n_layers = blk['wq'].shape[0]
    mlp = blk['w1'].shape[-1]

    # TODO(synk): generalize tile selection (largest divisor <= target).
    q_tile = 128 if t % 128 == 0 else t
    mlp_tile = 512 if mlp % 512 == 0 else mlp

    def spec_shared(arr):          # (R, C) shared across grid
        r, c = arr.shape
        return pl.BlockSpec((r, c), lambda i, l: (0, 0))

    def spec_layer(arr):           # (NL, R, C), streamed per layer
        _, r, c = arr.shape
        return pl.BlockSpec((pl.Squeezed(), r, c), lambda i, l: (l, 0, 0))

    in_specs = [
        pl.BlockSpec((pl.Squeezed(), t, d), lambda i, l: (i, 0, 0)),   # x0
        spec_shared(lnp_g), spec_shared(lnp_b),
        spec_layer(blk['ln1_g']), spec_layer(blk['ln1_b']),
        spec_layer(blk['wq']), spec_layer(blk['bq']),
        spec_layer(blk['wk']), spec_layer(blk['bk']),
        spec_layer(blk['wv']), spec_layer(blk['bv']),
        spec_layer(blk['wo']), spec_layer(blk['bo']),
        spec_layer(blk['ln2_g']), spec_layer(blk['ln2_b']),
        spec_layer(blk['w1']), spec_layer(blk['b1']),
        spec_layer(blk['w2']), spec_layer(blk['b2']),
    ]
    kern = functools.partial(_blocks_kernel, n_heads=n_heads, n_layers=n_layers,
                             q_tile=q_tile, mlp_tile=mlp_tile)
    return pl.pallas_call(
        kern,
        out_shape=jax.ShapeDtypeStruct((b, t, d), F32),
        grid=(b, n_layers),
        in_specs=in_specs,
        out_specs=pl.BlockSpec((pl.Squeezed(), t, d), lambda i, l: (i, 0, 0)),
        compiler_params=pltpu.CompilerParams(
            dimension_semantics=("parallel", "arbitrary"),
            vmem_limit_bytes=64 * 1024 * 1024),
    )(x0, lnp_g, lnp_b,
      blk['ln1_g'], blk['ln1_b'],
      blk['wq'], blk['bq'], blk['wk'], blk['bk'], blk['wv'], blk['bv'],
      blk['wo'], blk['bo'],
      blk['ln2_g'], blk['ln2_b'],
      blk['w1'], blk['b1'], blk['w2'], blk['b2'])


# ---------------------------------------------------------------------------
# full forward: Pallas equivalent of _AudioEncoderEngine.forward
# ---------------------------------------------------------------------------
def audio_encoder(x, pos, params, n_heads):
    """x: (B, Cin, L) mel input; pos: (T, D) with T = L // 2."""
    # Pure layout plumbing in the wrapper: transpose to time-major, pad by 1 on
    # each side, split into even/odd phases (so the stride-2 conv needs no
    # strided access inside the kernel) and cast to bf16.
    xt = jnp.transpose(x, (0, 2, 1))                 # (B, L, Cin)
    xp = jnp.pad(xt, ((0, 0), (1, 1), (0, 0)))       # (B, L+2, Cin)
    xe = xp[:, 0::2, :].astype(BF16)                 # (B, T+1, Cin)
    xo = xp[:, 1::2, :].astype(BF16)                 # (B, T+1, Cin)
    x0 = _frontend(xe, xo, pos, params['c1w'], params['c1b'],
                   params['c2w'], params['c2b'])
    return _transformer(x0, params['lnp_g'], params['lnp_b'],
                        params['blocks'], n_heads)


# ---------------------------------------------------------------------------
# deterministic synthetic parameters
# ---------------------------------------------------------------------------
def init_params(key, n_layers, cin, d, mlp, n_heads, t):
    keys = iter(jax.random.split(key, 64))

    def wmat(shape, scale=0.05):
        return (scale * jax.random.normal(next(keys), shape, F32)).astype(BF16)

    def vec(shape, scale=0.02):
        return scale * jax.random.normal(next(keys), shape, F32)

    ones = lambda *s: jnp.ones(s, F32)
    zeros = lambda *s: jnp.zeros(s, F32)

    return {
        'c1w': wmat((3, cin, d)), 'c1b': vec((1, d)),
        'c2w': wmat((3, d, d)), 'c2b': vec((1, d)),
        'lnp_g': ones(1, d), 'lnp_b': zeros(1, d),
        'pos': 0.1 * jax.random.normal(next(keys), (t, d), F32),
        'blocks': {
            'ln1_g': ones(n_layers, 1, d), 'ln1_b': zeros(n_layers, 1, d),
            'wq': wmat((n_layers, d, d)), 'bq': vec((n_layers, 1, d)),
            'wk': wmat((n_layers, d, d)), 'bk': vec((n_layers, 1, d)),
            'wv': wmat((n_layers, d, d)), 'bv': vec((n_layers, 1, d)),
            'wo': wmat((n_layers, d, d)), 'bo': vec((n_layers, 1, d)),
            'ln2_g': ones(n_layers, 1, d), 'ln2_b': zeros(n_layers, 1, d),
            'w1': wmat((n_layers, d, mlp)), 'b1': vec((n_layers, 1, mlp)),
            'w2': wmat((n_layers, mlp, d)), 'b2': vec((n_layers, 1, d)),
        },
    }


# ---------------------------------------------------------------------------
# pure-JAX reference (independent conv indexing + per-head attention loop)
# ---------------------------------------------------------------------------
def _ref_attention(xn, wq, bq, wk, bk, wv, bv, wo, bo, n_heads):
    t, d = xn.shape
    dh = d // n_heads
    q = _dot_bf16(xn, wq) + bq
    k = _dot_bf16(xn, wk) + bk
    v = _dot_bf16(xn, wv) + bv
    outs = []
    for h in range(n_heads):
        sl = slice(h * dh, (h + 1) * dh)
        s = jnp.dot(q[:, sl].astype(BF16), k[:, sl].astype(BF16).T,
                    preferred_element_type=F32) * (dh ** -0.5)
        s = s - jnp.max(s, axis=-1, keepdims=True)
        p = jnp.exp(s)
        p = p / jnp.sum(p, axis=-1, keepdims=True)
        outs.append(jnp.dot(p.astype(BF16), v[:, sl].astype(BF16),
                            preferred_element_type=F32))
    o = jnp.concatenate(outs, axis=-1)
    return jnp.dot(o.astype(BF16), wo, preferred_element_type=F32) + bo


def _ref_mlp(xn, w1, b1, w2, b2):
    h = _gelu_tanh(_dot_bf16(xn, w1) + b1)
    return _dot_bf16(h, w2) + b2


def reference(x, pos, params, n_heads):
    b, cin, length = x.shape
    t = length // 2
    blk = params['blocks']
    n_layers = blk['wq'].shape[0]
    xt = jnp.transpose(x, (0, 2, 1))
    xp = jnp.pad(xt, ((0, 0), (1, 1), (0, 0)))       # (B, L+2, Cin)
    outs = []
    for bi in range(b):
        xpb = xp[bi]
        h = _gelu_tanh(_conv_taps(xpb[0:length], xpb[1:length + 1],
                                  xpb[2:length + 2],
                                  params['c1w'], params['c1b']))    # (L, D)
        hp = jnp.pad(h, ((1, 1), (0, 0)))                            # (L+2, D)
        g = _gelu_tanh(_conv_taps(hp[0:2 * t:2], hp[1:2 * t + 1:2],
                                  hp[2:2 * t + 2:2],
                                  params['c2w'], params['c2b']))     # (T, D)
        xb = g + pos
        for l in range(n_layers):
            xn = _layernorm(xb, blk['ln1_g'][l], blk['ln1_b'][l])
            xb = xb + _ref_attention(xn, blk['wq'][l], blk['bq'][l],
                                     blk['wk'][l], blk['bk'][l],
                                     blk['wv'][l], blk['bv'][l],
                                     blk['wo'][l], blk['bo'][l], n_heads)
            xn = _layernorm(xb, blk['ln2_g'][l], blk['ln2_b'][l])
            xb = xb + _ref_mlp(xn, blk['w1'][l], blk['b1'][l],
                               blk['w2'][l], blk['b2'][l])
        outs.append(_layernorm(xb, params['lnp_g'], params['lnp_b']))
    return jnp.stack(outs)


if __name__ == "__main__":
    B, CIN, L, D, H, MLP, NBLOCKS = 2, 8, 16, 32, 4, 128, 2
    T = L // 2

    key = jax.random.PRNGKey(0)
    kx, kp = jax.random.split(key)
    x = jax.random.normal(kx, (B, CIN, L), F32)
    params = init_params(kp, NBLOCKS, CIN, D, MLP, H, T)
    pos = params['pos']

    out = audio_encoder(x, pos, params, H)
    out = jax.block_until_ready(out)

    ref = reference(x, pos, params, H)
    assert out.shape == (B, T, D)
    err = float(jnp.max(jnp.abs(out - ref)))
    assert jnp.allclose(out, ref, atol=2e-2, rtol=2e-2), err

    print("KERNEL_OK")
</pallas_src>

<mosaic_0001>
module attributes {stable_mosaic.version = 11 : i64} {
  func.func @_frontend_kernel(%arg0: i32, %arg1: memref<1x9x8xbf16, #tpu.memory_space<vmem>>, %arg2: memref<1x9x8xbf16, #tpu.memory_space<vmem>>, %arg3: memref<8x32xf32, #tpu.memory_space<vmem>>, %arg4: memref<3x8x32xbf16, #tpu.memory_space<vmem>>, %arg5: memref<1x32xf32, #tpu.memory_space<vmem>>, %arg6: memref<3x32x32xbf16, #tpu.memory_space<vmem>>, %arg7: memref<1x32xf32, #tpu.memory_space<vmem>>, %arg8: memref<1x8x32xf32, #tpu.memory_space<vmem>>) attributes {dimension_semantics = [#tpu.dimension_semantics<parallel>], iteration_bounds = array<i64: 2>, scalar_prefetch = 0 : i64, scratch_operands = 0 : i64, tpu.core_type = #tpu.core_type<tc>, window_params = [{transform_indices = @transform_0, window_bounds = array<i64: 1, 9, 8>}, {transform_indices = @transform_1, window_bounds = array<i64: 1, 9, 8>}, {pipeline_mode = #tpu.pipeline_mode<synchronous>, transform_indices = @transform_2, window_bounds = array<i64: 8, 32>}, {pipeline_mode = #tpu.pipeline_mode<synchronous>, transform_indices = @transform_3, window_bounds = array<i64: 3, 8, 32>}, {pipeline_mode = #tpu.pipeline_mode<synchronous>, transform_indices = @transform_4, window_bounds = array<i64: 1, 32>}, {pipeline_mode = #tpu.pipeline_mode<synchronous>, transform_indices = @transform_5, window_bounds = array<i64: 3, 32, 32>}, {pipeline_mode = #tpu.pipeline_mode<synchronous>, transform_indices = @transform_6, window_bounds = array<i64: 1, 32>}, {transform_indices = @transform_7, window_bounds = array<i64: 1, 8, 32>}]} {
    %c0 = arith.constant 0 : index
    %c0_0 = arith.constant 0 : index
    %c0_1 = arith.constant 0 : index
    %0 = vector.load %arg1[%c0, %c0_0, %c0_1] : memref<1x9x8xbf16, #tpu.memory_space<vmem>>, vector<1x9x8xbf16>
    %1 = vector.shape_cast %0 : vector<1x9x8xbf16> to vector<9x8xbf16>
    %c0_2 = arith.constant 0 : index
    %c0_3 = arith.constant 0 : index
    %c0_4 = arith.constant 0 : index
    %2 = vector.load %arg2[%c0_2, %c0_3, %c0_4] : memref<1x9x8xbf16, #tpu.memory_space<vmem>>, vector<1x9x8xbf16>
    %3 = vector.shape_cast %2 : vector<1x9x8xbf16> to vector<9x8xbf16>
    %c0_5 = arith.constant 0 : index
    %c0_6 = arith.constant 0 : index
    %c0_7 = arith.constant 0 : index
    %4 = vector.load %arg4[%c0_5, %c0_6, %c0_7] : memref<3x8x32xbf16, #tpu.memory_space<vmem>>, vector<3x8x32xbf16>
    %c0_8 = arith.constant 0 : index
    %c0_9 = arith.constant 0 : index
    %5 = vector.load %arg5[%c0_8, %c0_9] : memref<1x32xf32, #tpu.memory_space<vmem>>, vector<1x32xf32>
    %c0_10 = arith.constant 0 : index
    %c0_11 = arith.constant 0 : index
    %c0_12 = arith.constant 0 : index
    %6 = vector.load %arg6[%c0_10, %c0_11, %c0_12] : memref<3x32x32xbf16, #tpu.memory_space<vmem>>, vector<3x32x32xbf16>
    %c0_13 = arith.constant 0 : index
    %c0_14 = arith.constant 0 : index
    %7 = vector.load %arg7[%c0_13, %c0_14] : memref<1x32xf32, #tpu.memory_space<vmem>>, vector<1x32xf32>
    %8 = vector.extract_strided_slice %1 {offsets = [0, 0], sizes = [8, 8], strides = [1, 1]} : vector<9x8xbf16> to vector<8x8xbf16>
    %9 = vector.extract_strided_slice %3 {offsets = [0, 0], sizes = [8, 8], strides = [1, 1]} : vector<9x8xbf16> to vector<8x8xbf16>
    %10 = vector.extract_strided_slice %1 {offsets = [1, 0], sizes = [8, 8], strides = [1, 1]} : vector<9x8xbf16> to vector<8x8xbf16>
    %11 = vector.extract_strided_slice %4 {offsets = [0, 0, 0], sizes = [1, 8, 32], strides = [1, 1, 1]} : vector<3x8x32xbf16> to vector<1x8x32xbf16>
    %12 = vector.shape_cast %11 : vector<1x8x32xbf16> to vector<8x32xbf16>
    %cst = arith.constant dense<0.000000e+00> : vector<8x32xf32>
    %13 = tpu.matmul %8, %12, %cst {dimension_numbers = #tpu.dot_dimension_numbers<[1], [0], [0], [1], [0, 0, 1, 1], [], []>} : vector<8x8xbf16>, vector<8x32xbf16>, vector<8x32xf32> -> vector<8x32xf32>
    %14 = vector.extract_strided_slice %4 {offsets = [1, 0, 0], sizes = [1, 8, 32], strides = [1, 1, 1]} : vector<3x8x32xbf16> to vector<1x8x32xbf16>
    %15 = vector.shape_cast %14 : vector<1x8x32xbf16> to vector<8x32xbf16>
    %cst_15 = arith.constant dense<0.000000e+00> : vector<8x32xf32>
    %16 = tpu.matmul %9, %15, %cst_15 {dimension_numbers = #tpu.dot_dimension_numbers<[1], [0], [0], [1], [0, 0, 1, 1], [], []>} : vector<8x8xbf16>, vector<8x32xbf16>, vector<8x32xf32> -> vector<8x32xf32>
    %17 = arith.addf %13, %16 : vector<8x32xf32>
    %18 = vector.extract_strided_slice %4 {offsets = [2, 0, 0], sizes = [1, 8, 32], strides = [1, 1, 1]} : vector<3x8x32xbf16> to vector<1x8x32xbf16>
    %19 = vector.shape_cast %18 : vector<1x8x32xbf16> to vector<8x32xbf16>
    %cst_16 = arith.constant dense<0.000000e+00> : vector<8x32xf32>
    %20 = tpu.matmul %10, %19, %cst_16 {dimension_numbers = #tpu.dot_dimension_numbers<[1], [0], [0], [1], [0, 0, 1, 1], [], []>} : vector<8x8xbf16>, vector<8x32xbf16>, vector<8x32xf32> -> vector<8x32xf32>
    %21 = arith.addf %17, %20 : vector<8x32xf32>
    %22 = vector.broadcast %5 : vector<1x32xf32> to vector<8x32xf32>
    %23 = arith.addf %21, %22 : vector<8x32xf32>
    %cst_17 = arith.constant 5.000000e-01 : f32
    %24 = vector.broadcast %cst_17 : f32 to vector<8x32xf32>
    %25 = arith.mulf %24, %23 : vector<8x32xf32>
    %cst_18 = arith.constant 4.471500e-02 : f32
    %26 = vector.broadcast %cst_18 : f32 to vector<8x32xf32>
    %27 = arith.mulf %26, %23 : vector<8x32xf32>
    %28 = arith.mulf %27, %23 : vector<8x32xf32>
    %29 = arith.mulf %28, %23 : vector<8x32xf32>
    %30 = arith.addf %23, %29 : vector<8x32xf32>
    %cst_19 = arith.constant 0.797884583 : f32
    %31 = vector.broadcast %cst_19 : f32 to vector<8x32xf32>
    %32 = arith.mulf %31, %30 : vector<8x32xf32>
    %33 = math.tanh %32 : vector<8x32xf32>
    %cst_20 = arith.constant 1.000000e+00 : f32
    %34 = vector.broadcast %cst_20 : f32 to vector<8x32xf32>
    %35 = arith.addf %34, %33 : vector<8x32xf32>
    %36 = arith.mulf %25, %35 : vector<8x32xf32>
    %37 = vector.extract_strided_slice %3 {offsets = [0, 0], sizes = [8, 8], strides = [1, 1]} : vector<9x8xbf16> to vector<8x8xbf16>
    %38 = vector.extract_strided_slice %1 {offsets = [1, 0], sizes = [8, 8], strides = [1, 1]} : vector<9x8xbf16> to vector<8x8xbf16>
    %39 = vector.extract_strided_slice %3 {offsets = [1, 0], sizes = [8, 8], strides = [1, 1]} : vector<9x8xbf16> to vector<8x8xbf16>
    %40 = vector.extract_strided_slice %4 {offsets = [0, 0, 0], sizes = [1, 8, 32], strides = [1, 1, 1]} : vector<3x8x32xbf16> to vector<1x8x32xbf16>
    %41 = vector.shape_cast %40 : vector<1x8x32xbf16> to vector<8x32xbf16>
    %cst_21 = arith.constant dense<0.000000e+00> : vector<8x32xf32>
    %42 = tpu.matmul %37, %41, %cst_21 {dimension_numbers = #tpu.dot_dimension_numbers<[1], [0], [0], [1], [0, 0, 1, 1], [], []>} : vector<8x8xbf16>, vector<8x32xbf16>, vector<8x32xf32> -> vector<8x32xf32>
    %43 = vector.extract_strided_slice %4 {offsets = [1, 0, 0], sizes = [1, 8, 32], strides = [1, 1, 1]} : vector<3x8x32xbf16> to vector<1x8x32xbf16>
    %44 = vector.shape_cast %43 : vector<1x8x32xbf16> to vector<8x32xbf16>
    %cst_22 = arith.constant dense<0.000000e+00> : vector<8x32xf32>
    %45 = tpu.matmul %38, %44, %cst_22 {dimension_numbers = #tpu.dot_dimension_numbers<[1], [0], [0], [1], [0, 0, 1, 1], [], []>} : vector<8x8xbf16>, vector<8x32xbf16>, vector<8x32xf32> -> vector<8x32xf32>
    %46 = arith.addf %42, %45 : vector<8x32xf32>
    %47 = vector.extract_strided_slice %4 {offsets = [2, 0, 0], sizes = [1, 8, 32], strides = [1, 1, 1]} : vector<3x8x32xbf16> to vector<1x8x32xbf16>
    %48 = vector.shape_cast %47 : vector<1x8x32xbf16> to vector<8x32xbf16>
    %cst_23 = arith.constant dense<0.000000e+00> : vector<8x32xf32>
    %49 = tpu.matmul %39, %48, %cst_23 {dimension_numbers = #tpu.dot_dimension_numbers<[1], [0], [0], [1], [0, 0, 1, 1], [], []>} : vector<8x8xbf16>, vector<8x32xbf16>, vector<8x32xf32> -> vector<8x32xf32>
    %50 = arith.addf %46, %49 : vector<8x32xf32>
    %51 = vector.broadcast %5 : vector<1x32xf32> to vector<8x32xf32>
    %52 = arith.addf %50, %51 : vector<8x32xf32>
    %cst_24 = arith.constant 5.000000e-01 : f32
    %53 = vector.broadcast %cst_24 : f32 to vector<8x32xf32>
    %54 = arith.mulf %53, %52 : vector<8x32xf32>
    %cst_25 = arith.constant 4.471500e-02 : f32
    %55 = vector.broadcast %cst_25 : f32 to vector<8x32xf32>
    %56 = arith.mulf %55, %52 : vector<8x32xf32>
    %57 = arith.mulf %56, %52 : vector<8x32xf32>
    %58 = arith.mulf %57, %52 : vector<8x32xf32>
    %59 = arith.addf %52, %58 : vector<8x32xf32>
    %cst_26 = arith.constant 0.797884583 : f32
    %60 = vector.broadcast %cst_26 : f32 to vector<8x32xf32>
    %61 = arith.mulf %60, %59 : vector<8x32xf32>
    %62 = math.tanh %61 : vector<8x32xf32>
    %cst_27 = arith.constant 1.000000e+00 : f32
    %63 = vector.broadcast %cst_27 : f32 to vector<8x32xf32>
    %64 = arith.addf %63, %62 : vector<8x32xf32>
    %65 = arith.mulf %54, %64 : vector<8x32xf32>
    %cst_28 = arith.constant 0.000000e+00 : f32
    %66 = vector.broadcast %cst_28 : f32 to vector<1x32xf32>
    %67 = vector.extract_strided_slice %65 {offsets = [0, 0], sizes = [7, 32], strides = [1, 1]} : vector<8x32xf32> to vector<7x32xf32>
    %68 = tpu.concatenate %66, %67 in 0 : vector<1x32xf32>, vector<7x32xf32> -> vector<8x32xf32>
    %69 = vector.extract_strided_slice %6 {offsets = [0, 0, 0], sizes = [1, 32, 32], strides = [1, 1, 1]} : vector<3x32x32xbf16> to vector<1x32x32xbf16>
    %70 = vector.shape_cast %69 : vector<1x32x32xbf16> to vector<32x32xbf16>
    %71 = arith.truncf %68 : vector<8x32xf32> to vector<8x32xbf16>
    %cst_29 = arith.constant dense<0.000000e+00> : vector<8x32xf32>
    %72 = tpu.matmul %71, %70, %cst_29 {dimension_numbers = #tpu.dot_dimension_numbers<[1], [0], [0], [1], [0, 0, 1, 1], [], []>} : vector<8x32xbf16>, vector<32x32xbf16>, vector<8x32xf32> -> vector<8x32xf32>
    %73 = vector.extract_strided_slice %6 {offsets = [1, 0, 0], sizes = [1, 32, 32], strides = [1, 1, 1]} : vector<3x32x32xbf16> to vector<1x32x32xbf16>
    %74 = vector.shape_cast %73 : vector<1x32x32xbf16> to vector<32x32xbf16>
    %75 = arith.truncf %36 : vector<8x32xf32> to vector<8x32xbf16>
    %cst_30 = arith.constant dense<0.000000e+00> : vector<8x32xf32>
    %76 = tpu.matmul %75, %74, %cst_30 {dimension_numbers = #tpu.dot_dimension_numbers<[1], [0], [0], [1], [0, 0, 1, 1], [], []>} : vector<8x32xbf16>, vector<32x32xbf16>, vector<8x32xf32> -> vector<8x32xf32>
    %77 = arith.addf %72, %76 : vector<8x32xf32>
    %78 = vector.extract_strided_slice %6 {offsets = [2, 0, 0], sizes = [1, 32, 32], strides = [1, 1, 1]} : vector<3x32x32xbf16> to vector<1x32x32xbf16>
    %79 = vector.shape_cast %78 : vector<1x32x32xbf16> to vector<32x32xbf16>
    %80 = arith.truncf %65 : vector<8x32xf32> to vector<8x32xbf16>
    %cst_31 = arith.constant dense<0.000000e+00> : vector<8x32xf32>
    %81 = tpu.matmul %80, %79, %cst_31 {dimension_numbers = #tpu.dot_dimension_numbers<[1], [0], [0], [1], [0, 0, 1, 1], [], []>} : vector<8x32xbf16>, vector<32x32xbf16>, vector<8x32xf32> -> vector<8x32xf32>
    %82 = arith.addf %77, %81 : vector<8x32xf32>
    %83 = vector.broadcast %7 : vector<1x32xf32> to vector<8x32xf32>
    %84 = arith.addf %82, %83 : vector<8x32xf32>
    %cst_32 = arith.constant 5.000000e-01 : f32
    %85 = vector.broadcast %cst_32 : f32 to vector<8x32xf32>
    %86 = arith.mulf %85, %84 : vector<8x32xf32>
    %cst_33 = arith.constant 4.471500e-02 : f32
    %87 = vector.broadcast %cst_33 : f32 to vector<8x32xf32>
    %88 = arith.mulf %87, %84 : vector<8x32xf32>
    %89 = arith.mulf %88, %84 : vector<8x32xf32>
    %90 = arith.mulf %89, %84 : vector<8x32xf32>
    %91 = arith.addf %84, %90 : vector<8x32xf32>
    %cst_34 = arith.constant 0.797884583 : f32
    %92 = vector.broadcast %cst_34 : f32 to vector<8x32xf32>
    %93 = arith.mulf %92, %91 : vector<8x32xf32>
    %94 = math.tanh %93 : vector<8x32xf32>
    %cst_35 = arith.constant 1.000000e+00 : f32
    %95 = vector.broadcast %cst_35 : f32 to vector<8x32xf32>
    %96 = arith.addf %95, %94 : vector<8x32xf32>
    %97 = arith.mulf %86, %96 : vector<8x32xf32>
    %c0_36 = arith.constant 0 : index
    %c0_37 = arith.constant 0 : index
    %98 = vector.load %arg3[%c0_36, %c0_37] : memref<8x32xf32, #tpu.memory_space<vmem>>, vector<8x32xf32>
    %99 = arith.addf %97, %98 : vector<8x32xf32>
    %c0_38 = arith.constant 0 : index
    %c0_39 = arith.constant 0 : index
    %c0_40 = arith.constant 0 : index
    %100 = vector.load %arg8[%c0_38, %c0_39, %c0_40] : memref<1x8x32xf32, #tpu.memory_space<vmem>>, vector<1x8x32xf32>
    %101 = vector.shape_cast %100 : vector<1x8x32xf32> to vector<8x32xf32>
    %102 = vector.shape_cast %99 : vector<8x32xf32> to vector<1x8x32xf32>
    tpu.vector_store %arg8[%c0_38, %c0_39, %c0_40], %102 {strides = array<i32>} : memref<1x8x32xf32, #tpu.memory_space<vmem>>, vector<1x8x32xf32>,
    return
  }
  func.func @transform_0(%arg0: i32) -> (i32, i32, i32) {
    %c0_i32 = arith.constant 0 : i32
    %c0_i32_0 = arith.constant 0 : i32
    %c0_i32_1 = arith.constant 0 : i32
    return %arg0, %c0_i32, %c0_i32_0 : i32, i32, i32
  }
  func.func @transform_1(%arg0: i32) -> (i32, i32, i32) {
    %c0_i32 = arith.constant 0 : i32
    %c0_i32_0 = arith.constant 0 : i32
    %c0_i32_1 = arith.constant 0 : i32
    return %arg0, %c0_i32, %c0_i32_0 : i32, i32, i32
  }
  func.func @transform_2(%arg0: i32) -> (i32, i32) {
    %c0_i32 = arith.constant 0 : i32
    %c0_i32_0 = arith.constant 0 : i32
    %c0_i32_1 = arith.constant 0 : i32
    return %c0_i32, %c0_i32_0 : i32, i32
  }
  func.func @transform_3(%arg0: i32) -> (i32, i32, i32) {
    %c0_i32 = arith.constant 0 : i32
    %c0_i32_0 = arith.constant 0 : i32
    %c0_i32_1 = arith.constant 0 : i32
    %c0_i32_2 = arith.constant 0 : i32
    return %c0_i32, %c0_i32_0, %c0_i32_1 : i32, i32, i32
  }
  func.func @transform_4(%arg0: i32) -> (i32, i32) {
    %c0_i32 = arith.constant 0 : i32
    %c0_i32_0 = arith.constant 0 : i32
    %c0_i32_1 = arith.constant 0 : i32
    return %c0_i32, %c0_i32_0 : i32, i32
  }
  func.func @transform_5(%arg0: i32) -> (i32, i32, i32) {
    %c0_i32 = arith.constant 0 : i32
    %c0_i32_0 = arith.constant 0 : i32
    %c0_i32_1 = arith.constant 0 : i32
    %c0_i32_2 = arith.constant 0 : i32
    return %c0_i32, %c0_i32_0, %c0_i32_1 : i32, i32, i32
  }
  func.func @transform_6(%arg0: i32) -> (i32, i32) {
    %c0_i32 = arith.constant 0 : i32
    %c0_i32_0 = arith.constant 0 : i32
    %c0_i32_1 = arith.constant 0 : i32
    return %c0_i32, %c0_i32_0 : i32, i32
  }
  func.func @transform_7(%arg0: i32) -> (i32, i32, i32) {
    %c0_i32 = arith.constant 0 : i32
    %c0_i32_0 = arith.constant 0 : i32
    %c0_i32_1 = arith.constant 0 : i32
    return %arg0, %c0_i32, %c0_i32_0 : i32, i32, i32
  }
}

</mosaic_0001>

<llo_original>
// kernel: tpu_custom_call.1
$region0: #{tpu_custom_call.1}
  #allocation0 [shape = 'u32[]', space=smem, size = 0x4, offset = 0x4, fixed_abs, tag = 'smem constant byte address 0x4 - core index']
  #allocation1 [shape = 'u32[144,128]{1,0:T(1,128)}', space=vmem, size = 0x12000, scoped, tag = 'internal scratch']
  %s0 = inlined_call_operand.vmem [shape: bf16[2,9,8], index: 0, kind: input, shape index: {}]
  %s1 = inlined_call_operand.vmem [shape: bf16[2,9,8], index: 1, kind: input, shape index: {}]
  %s2 = inlined_call_operand.vmem [shape: f32[8,32], index: 2, kind: input, shape index: {}]
  %s3 = inlined_call_operand.hbm [shape: bf16[3,8,32], index: 3, kind: input, shape index: {}]
  %s4 = inlined_call_operand.vmem [shape: f32[1,32], index: 4, kind: input, shape index: {}]
  %s5 = inlined_call_operand.vmem [shape: bf16[3,32,32], index: 5, kind: input, shape index: {}]
  %s6 = inlined_call_operand.vmem [shape: f32[1,32], index: 6, kind: input, shape index: {}]
  %s7 = inlined_call_operand.hbm [shape: f32[2,8,32], index: 7, kind: output, shape index: {}]
  %s8 = sld [smem:[#allocation0]]
  $region65: #{tpu_custom_call.1} parent=0
    _
  %s10 = ssub.s32 1, %s8
  %s11 = scalar_select 0, %s10, %s8
  $region1: #{tpu_custom_call.1} parent=0
    #allocation2 [shape = 'u8[6144]{0}', space=vmem, size = 0x1800, scoped, tag = 'input window, operand 3, single buffered']
    #allocation3 [shape = 's32[2]{0}', space=sflag, size = 0x8, scoped, tag = 'scoped memory for tpu_custom_call.1']
    #allocation4 [shape = 's32[2]{0}', space=sflag, size = 0x8, scoped, tag = 'scoped memory for tpu_custom_call.1']
    #allocation5 [shape = 'u8[8192]{0}', space=vmem, size = 0x2000, scoped, tag = 'output window, operand 0']
    %12 = vsyncpa [#allocation3], 0
    %13 = vsyncpa [#allocation4], 0
    %s14 = scalar_lea.sflag [#allocation4], 1
    %15 = vsyncpa %s14, 0
    loop: start=0, step=1, limit=4
    $region2: #{tpu_custom_call.1} parent=1 // loop_pre_header
      _
    $region3: #{tpu_custom_call.1} parent=1 // loop_header
      %s17 = sphi 0, %s21
      %p18 = scmp.ge.s32.totalorder %s17, 4
      %s27 = sphi 0, %s29
      %s30 = sphi 0, %s27
      %s31 = sphi 0, %s30
      %s47 = sphi 0, %s31
      %s53 = sphi 0, %s55
      %s56 = sphi 0, %s53
      %s57 = sphi 0, %s56
      %s73 = sphi 0, %s57
      %s77 = sphi 0, %s77
      %s79 = sphi 0, %s77
      %s80 = sphi 0, %s79
      %s94 = sphi 0, %s80
      %s98 = sphi 0, %s98
      %s100 = sphi 0, %s98
      %s101 = sphi 0, %s100
      %s115 = sphi 0, %s101
      %s119 = sphi 0, %s119
      %s121 = sphi 0, %s119
      %s122 = sphi 0, %s121
      %s136 = sphi 0, %s122
      %s140 = sphi 0, %s140
      %s142 = sphi 0, %s140
      %s143 = sphi 0, %s142
      %s157 = sphi 0, %s143
      %s161 = sphi 0, %s161
      %s163 = sphi 0, %s161
      %s164 = sphi 0, %s163
      %s178 = sphi 0, %s164
      %s184 = sphi 0, %s186
      %s187 = sphi 0, %s184
      %s188 = sphi 0, %s187
      %s204 = sphi 0, %s188
    $region4: #{tpu_custom_call.1} parent=1 // loop_header_branch
      %20 = sbr.rel (%p18) target = $region8
    $region5: #{tpu_custom_call.1} parent=1 // loop_body
      %s22 = ssub.s32 %s17, 1
      %s23 = ssub.s32 %s17, 2
      %s24 = sadd.s32 %s17, 1
      %s25 = ssub.s32 %s17, %s24
      %p26 = scmp.eq.s32.totalorder %s25, 0
      %s28 = sadd.s32 %s27, 1
      %s29 = scalar_select %p26, %s27, %s28
      %p32 = pneg %p26
      %p33 = scmp.eq.s32.totalorder %s17, 1
      %p34 = por %p32, %p33
      %p35 = scmp.ne.s32.totalorder %s27, %s30
      %p36 = scmp.eq.s32.totalorder %s17, 0
      %p37 = por %p35, %p36
      %p38 = scmp.ne.s32.totalorder %s27, %s30
      %p39 = scmp.eq.s32.totalorder %s22, 1
      %p40 = por %p38, %p39
      %p41 = scmp.ne.s32.totalorder %s30, %s31
      %p42 = scmp.eq.s32.totalorder %s22, 0
      %p43 = por %p41, %p42
      %p44 = scmp.ne.s32.totalorder %s30, %s31
      %p45 = scmp.eq.s32.totalorder %s23, 1
      %p46 = por %p44, %p45
      %p48 = scmp.ne.s32.totalorder %s31, %s47
      %p49 = scmp.eq.s32.totalorder %s23, 0
      %p50 = por %p48, %p49
      %s51 = ssub.s32 %s17, %s24
      %p52 = scmp.eq.s32.totalorder %s51, 0
      %s54 = sadd.s32 %s53, 1
      %s55 = scalar_select %p52, %s53, %s54
      %p58 = pneg %p52
      %p59 = scmp.eq.s32.totalorder %s17, 1
      %p60 = por %p58, %p59
      %p61 = scmp.ne.s32.totalorder %s53, %s56
      %p62 = scmp.eq.s32.totalorder %s17, 0
      %p63 = por %p61, %p62
      %p64 = scmp.ne.s32.totalorder %s53, %s56
      %p65 = scmp.eq.s32.totalorder %s22, 1
      %p66 = por %p64, %p65
      %p67 = scmp.ne.s32.totalorder %s56, %s57
      %p68 = scmp.eq.s32.totalorder %s22, 0
      %p69 = por %p67, %p68
      %p70 = scmp.ne.s32.totalorder %s56, %s57
      %p71 = scmp.eq.s32.totalorder %s23, 1
      %p72 = por %p70, %p71
      %p74 = scmp.ne.s32.totalorder %s57, %s73
      %p75 = scmp.eq.s32.totalorder %s23, 0
      %p76 = por %p74, %p75
      %s78 = sadd.s32 %s77, 1
      %p81 = scmp.eq.s32.totalorder %s17, 1
      %p82 = scmp.ne.s32.totalorder %s77, %s79
      %p83 = scmp.eq.s32.totalorder %s17, 0
      %p84 = por %p82, %p83
      %p85 = scmp.ne.s32.totalorder %s77, %s79
      %p86 = scmp.eq.s32.totalorder %s22, 1
      %p87 = por %p85, %p86
      %p88 = scmp.ne.s32.totalorder %s79, %s80
      %p89 = scmp.eq.s32.totalorder %s22, 0
      %p90 = por %p88, %p89
      %p91 = scmp.ne.s32.totalorder %s79, %s80
      %p92 = scmp.eq.s32.totalorder %s23, 1
      %p93 = por %p91, %p92
      %p95 = scmp.ne.s32.totalorder %s80, %s94
      %p96 = scmp.eq.s32.totalorder %s23, 0
      %p97 = por %p95, %p96
      %s99 = sadd.s32 %s98, 1
      %p102 = scmp.eq.s32.totalorder %s17, 1
      %p103 = scmp.ne.s32.totalorder %s98, %s100
      %p104 = scmp.eq.s32.totalorder %s17, 0
      %p105 = por %p103, %p104
      %p106 = scmp.ne.s32.totalorder %s98, %s100
      %p107 = scmp.eq.s32.totalorder %s22, 1
      %p108 = por %p106, %p107
      %p109 = scmp.ne.s32.totalorder %s100, %s101
      %p110 = scmp.eq.s32.totalorder %s22, 0
      %p111 = por %p109, %p110
      %p112 = scmp.ne.s32.totalorder %s100, %s101
      %p113 = scmp.eq.s32.totalorder %s23, 1
      %p114 = por %p112, %p113
      %p116 = scmp.ne.s32.totalorder %s101, %s115
      %p117 = scmp.eq.s32.totalorder %s23, 0
      %p118 = por %p116, %p117
      %s120 = sadd.s32 %s119, 1
      %p123 = scmp.eq.s32.totalorder %s17, 1
      %p124 = scmp.ne.s32.totalorder %s119, %s121
      %p125 = scmp.eq.s32.totalorder %s17, 0
      %p126 = por %p124, %p125
      %p127 = scmp.ne.s32.totalorder %s119, %s121
      %p128 = scmp.eq.s32.totalorder %s22, 1
      %p129 = por %p127, %p128
      %p130 = scmp.ne.s32.totalorder %s121, %s122
      %p131 = scmp.eq.s32.totalorder %s22, 0
      %p132 = por %p130, %p131
      %p133 = scmp.ne.s32.totalorder %s121, %s122
      %p134 = scmp.eq.s32.totalorder %s23, 1
      %p135 = por %p133, %p134
      %p137 = scmp.ne.s32.totalorder %s122, %s136
      %p138 = scmp.eq.s32.totalorder %s23, 0
      %p139 = por %p137, %p138
      %s141 = sadd.s32 %s140, 1
      %p144 = scmp.eq.s32.totalorder %s17, 1
      %p145 = scmp.ne.s32.totalorder %s140, %s142
      %p146 = scmp.eq.s32.totalorder %s17, 0
      %p147 = por %p145, %p146
      %p148 = scmp.ne.s32.totalorder %s140, %s142
      %p149 = scmp.eq.s32.totalorder %s22, 1
      %p150 = por %p148, %p149
      %p151 = scmp.ne.s32.totalorder %s142, %s143
      %p152 = scmp.eq.s32.totalorder %s22, 0
      %p153 = por %p151, %p152
      %p154 = scmp.ne.s32.totalorder %s142, %s143
      %p155 = scmp.eq.s32.totalorder %s23, 1
      %p156 = por %p154, %p155
      %p158 = scmp.ne.s32.totalorder %s143, %s157
      %p159 = scmp.eq.s32.totalorder %s23, 0
      %p160 = por %p158, %p159
      %s162 = sadd.s32 %s161, 1
      %p165 = scmp.eq.s32.totalorder %s17, 1
      %p166 = scmp.ne.s32.totalorder %s161, %s163
      %p167 = scmp.eq.s32.totalorder %s17, 0
      %p168 = por %p166, %p167
      %p169 = scmp.ne.s32.totalorder %s161, %s163
      %p170 = scmp.eq.s32.totalorder %s22, 1
      %p171 = por %p169, %p170
      %p172 = scmp.ne.s32.totalorder %s163, %s164
      %p173 = scmp.eq.s32.totalorder %s22, 0
      %p174 = por %p172, %p173
      %p175 = scmp.ne.s32.totalorder %s163, %s164
      %p176 = scmp.eq.s32.totalorder %s23, 1
      %p177 = por %p175, %p176
      %p179 = scmp.ne.s32.totalorder %s164, %s178
      %p180 = scmp.eq.s32.totalorder %s23, 0
      %p181 = por %p179, %p180
      %s182 = ssub.s32 %s17, %s24
      %p183 = scmp.eq.s32.totalorder %s182, 0
      %s185 = sadd.s32 %s184, 1
      %s186 = scalar_select %p183, %s184, %s185
      %p189 = pneg %p183
      %p190 = scmp.eq.s32.totalorder %s17, 1
      %p191 = por %p189, %p190
      %p192 = scmp.ne.s32.totalorder %s184, %s187
      %p193 = scmp.eq.s32.totalorder %s17, 0
      %p194 = por %p192, %p193
      %p195 = scmp.ne.s32.totalorder %s184, %s187
      %p196 = scmp.eq.s32.totalorder %s22, 1
      %p197 = por %p195, %p196
      %p198 = scmp.ne.s32.totalorder %s187, %s188
      %p199 = scmp.eq.s32.totalorder %s22, 0
      %p200 = por %p198, %p199
      %p201 = scmp.ne.s32.totalorder %s187, %s188
      %p202 = scmp.eq.s32.totalorder %s23, 1
      %p203 = por %p201, %p202
      %p205 = scmp.ne.s32.totalorder %s188, %s204
      %p206 = scmp.eq.s32.totalorder %s23, 0
      %p207 = por %p205, %p206
      %p208 = scmp.le.s32.totalorder 1, %s17
      %p209 = scmp.lt.s32.totalorder %s17, 3
      %p210 = pnand %p208, %p209
      %p211 = pneg %p210
      // Predicated region
      $region9: #{tpu_custom_call.1} parent=5 // pred_check
        _
      $region10: #{tpu_custom_call.1} parent=5 // pred_check_branch
        %213 = sbr.rel (%p210) target = $region12
      $region11: #{tpu_custom_call.1} parent=5 // pred_region
        %s214 = ssub.s32 %s17, 1
        // Predicated region
        $region13: #{tpu_custom_call.1} parent=11 // pred_check
          %p215 = pneg %p90
        $region14: #{tpu_custom_call.1} parent=11 // pred_check_branch
          %217 = sbr.rel (%p215) target = $region16
        $region15: #{tpu_custom_call.1} parent=11 // pred_region
          _
        $region16: #{tpu_custom_call.1} parent=11 // pred_fallthru
          _
        // Predicated region
        $region17: #{tpu_custom_call.1} parent=11 // pred_check
          %p218 = pneg %p111
        $region18: #{tpu_custom_call.1} parent=11 // pred_check_branch
          %220 = sbr.rel (%p218) target = $region20
        $region19: #{tpu_custom_call.1} parent=11 // pred_region
          %s222 = ssub.s32 192, 192
          %223 = vsyncadd [#allocation3], %s222
          %s224 = sshll.u32 [#allocation2], 4
          %s225 = int_to_ptr.vmem [resolvable:$true] %s224
          %230 = dma.hbm_to_vmem [thread:$0]  %s3, 192, %s225, [#allocation3], 64, 64, 4
        $region20: #{tpu_custom_call.1} parent=11 // pred_fallthru
          _
        // Predicated region
        $region21: #{tpu_custom_call.1} parent=11 // pred_check
          %p231 = pneg %p132
        $region22: #{tpu_custom_call.1} parent=11 // pred_check_branch
          %233 = sbr.rel (%p231) target = $region24
        $region23: #{tpu_custom_call.1} parent=11 // pred_region
          _
        $region24: #{tpu_custom_call.1} parent=11 // pred_fallthru
          _
        // Predicated region
        $region25: #{tpu_custom_call.1} parent=11 // pred_check
          %p234 = pneg %p153
        $region26: #{tpu_custom_call.1} parent=11 // pred_check_branch
          %236 = sbr.rel (%p234) target = $region28
        $region27: #{tpu_custom_call.1} parent=11 // pred_region
          _
        $region28: #{tpu_custom_call.1} parent=11 // pred_fallthru
          _
        // Predicated region
        $region29: #{tpu_custom_call.1} parent=11 // pred_check
          %p237 = pneg %p174
        $region30: #{tpu_custom_call.1} parent=11 // pred_check_branch
          %239 = sbr.rel (%p237) target = $region32
        $region31: #{tpu_custom_call.1} parent=11 // pred_region
          _
        $region32: #{tpu_custom_call.1} parent=11 // pred_fallthru
          _
      $region12: #{tpu_custom_call.1} parent=5 // pred_fallthru
        _
      %p240 = scmp.lt.s32.totalorder %s17, 2
      // Predicated region
      $region33: #{tpu_custom_call.1} parent=5 // pred_check
        %p241 = pneg %p240
      $region34: #{tpu_custom_call.1} parent=5 // pred_check_branch
        %243 = sbr.rel (%p241) target = $region36
      $region35: #{tpu_custom_call.1} parent=5 // pred_region
        // Predicated region
        $region37: #{tpu_custom_call.1} parent=35 // pred_check
          %p244 = pneg %p37
        $region38: #{tpu_custom_call.1} parent=35 // pred_check_branch
          %246 = sbr.rel (%p244) target = $region40
        $region39: #{tpu_custom_call.1} parent=35 // pred_region
          %p247 = scmp.lt.s32.totalorder %s17, 1
          %s248 = scalar_select %p247, %s17, 1
          %s249 = smul.addr %s248, 2
          %s250 = smul.addr %s249, 4
          %s251 = scalar_lea.vmem %s0, %s250
        $region40: #{tpu_custom_call.1} parent=35 // pred_fallthru
          _
        // Predicated region
        $region41: #{tpu_custom_call.1} parent=35 // pred_check
          %p252 = pneg %p63
        $region42: #{tpu_custom_call.1} parent=35 // pred_check_branch
          %254 = sbr.rel (%p252) target = $region44
        $region43: #{tpu_custom_call.1} parent=35 // pred_region
          %p255 = scmp.lt.s32.totalorder %s17, 1
          %s256 = scalar_select %p255, %s17, 1
          %s257 = smul.addr %s256, 2
          %s258 = smul.addr %s257, 4
          %s259 = scalar_lea.vmem %s1, %s258
        $region44: #{tpu_custom_call.1} parent=35 // pred_fallthru
          _
      $region36: #{tpu_custom_call.1} parent=5 // pred_fallthru
        _
      %p260 = scmp.le.s32.totalorder 1, %s17
      %p261 = scmp.lt.s32.totalorder %s17, 3
      %p262 = pnand %p260, %p261
      %p263 = pneg %p262
      // Predicated region
      $region45: #{tpu_custom_call.1} parent=5 // pred_check
        _
      $region46: #{tpu_custom_call.1} parent=5 // pred_check_branch
        %265 = sbr.rel (%p262) target = $region48
      $region47: #{tpu_custom_call.1} parent=5 // pred_region
        %s266 = ssub.s32 %s17, 1
        // Predicated region
        $region49: #{tpu_custom_call.1} parent=47 // pred_check
          %p267 = pneg %p111
        $region50: #{tpu_custom_call.1} parent=47 // pred_check_branch
          %269 = sbr.rel (%p267) target = $region52
        $region51: #{tpu_custom_call.1} parent=47 // pred_region
          %270 = dma.done [#allocation3], 192
        $region52: #{tpu_custom_call.1} parent=47 // pred_fallthru
          _
        %p271 = scmp.lt.s32.totalorder %s22, 1
        %s272 = scalar_select %p271, %s22, 1
        %s273 = smul.addr %s272, 2
        %s274 = smul.addr %s273, 4
        %s275 = scalar_lea.vmem %s0, %s274
        %p276 = pneg %p43
        %p277 = pneg %p40
        %p278 = scmp.lt.s32.totalorder %s22, 1
        %s279 = scalar_select %p278, %s22, 1
        %s280 = smul.addr %s279, 2
        %s281 = smul.addr %s280, 4
        %s282 = scalar_lea.vmem %s1, %s281
        %p283 = pneg %p69
        %p284 = pneg %p66
        %p285 = pneg %p90
        %p286 = pneg %p87
        %p287 = pneg %p111
        %p288 = pneg %p108
        %p289 = pneg %p132
        %p290 = pneg %p129
        %p291 = pneg %p153
        %p292 = pneg %p150
        %p293 = pneg %p174
        %p294 = pneg %p171
        %p295 = pneg %p200
        %p296 = pneg %p197
        %s297 = sand.u32 %s187, 1
        %s298 = scalar_lea.sflag [#allocation4], %s297
        %s299 = sand.u32 %s187, 1
        %s300 = smul.addr %s299, 8
        %s301 = scalar_lea.vmem [#allocation5], %s300
        %p302 = scmp.lt.s32.totalorder %s22, 1
        %s303 = scalar_select %p302, %s22, 1
        %s304 = smul.addr %s303, 2
        %s305 = smul.addr %s304, 4
        %s306 = scalar_lea.vmem %s0, %s305
        %p307 = scmp.lt.s32.totalorder %s22, 1
        %s308 = scalar_select %p307, %s22, 1
        %s309 = smul.addr %s308, 2
        %s310 = smul.addr %s309, 4
        %s311 = scalar_lea.vmem %s1, %s310
        %v313 = vld [vmem:[%s306] sm:$0xf]
        %v314 = vld [vmem:[%s306 + $0x4] sm:$0x1]
        %v315 = vld [vmem:[%s311] sm:$0xf]
        %v316 = vld [vmem:[%s311 + $0x4] sm:$0x1]
        %v317 = vld [vmem:[#allocation2] sm:$0xf]
        %v318 = vld [vmem:[#allocation2 + $0x4] sm:$0xf]
        %v319 = vld [vmem:[#allocation2 + $0x8] sm:$0xf]
        %v320 = vld [vmem:[%s4] sm:$0x1]
        %v321 = vld [vmem:[%s5] sm:$0xf]
        %v322 = vld [vmem:[%s5 + $0x4] sm:$0xf]
        %v323 = vld [vmem:[%s5 + $0x8] sm:$0xf]
        %v324 = vld [vmem:[%s5 + $0xc] sm:$0xf]
        %v325 = vld [vmem:[%s5 + $0x10] sm:$0xf]
        %v326 = vld [vmem:[%s5 + $0x14] sm:$0xf]
        %v327 = vld [vmem:[%s5 + $0x18] sm:$0xf]
        %v328 = vld [vmem:[%s5 + $0x1c] sm:$0xf]
        %v329 = vld [vmem:[%s5 + $0x20] sm:$0xf]
        %v330 = vld [vmem:[%s5 + $0x24] sm:$0xf]
        %v331 = vld [vmem:[%s5 + $0x28] sm:$0xf]
        %v332 = vld [vmem:[%s5 + $0x2c] sm:$0xf]
        %v333 = vld [vmem:[%s6] sm:$0x1]
        %vm334 = vcmask 64512
        %v336 = vsel %vm334, %v315, 0
        %vm338 = vcmask 1043456
        %v340 = vsel %vm338, %v318, 0
        %342 = vmatprep.subr.bf16.mxu0 0
        %343 = vmatpush1.bf16.msra.mxu0 0
        %344 = vmatprep.subr.bf16.mxu0 0
        %345 = vmatpush1.bf16.msra.mxu0 0
        %346 = vmatprep.subr.bf16.mxu0 0
        %347 = vmatpush1.bf16.msra.mxu0 0
        %348 = vmatprep.subr.bf16.mxu0 0
        %349 = vmatpush1.bf16.msra.mxu0 0
        %350 = vmatprep.subr.bf16.mxu0 0
        %351 = vmatpush1.bf16.msra.mxu0 0
        %352 = vmatprep.subr.bf16.mxu0 0
        %353 = vmatpush1.bf16.msra.mxu0 0
        %354 = vmatprep.subr.bf16.mxu0 0
        %355 = vmatpush1.bf16.msra.mxu0 0
        %356 = vmatprep.subr.bf16.mxu0 0
        %357 = vmatpush1.bf16.msra.mxu0 %v340
        %358 = vmatprep.subr.bf16.mxu0 0
        %359 = vmatpush2.bf16.msra.mxu0 0
        %360 = vmatprep.subr.bf16.mxu0 0
        %361 = vmatpush2.bf16.msra.mxu0 0
        %362 = vmatprep.subr.bf16.mxu0 0
        %363 = vmatpush2.bf16.msra.mxu0 0
        %364 = vmatprep.subr.bf16.mxu0 0
        %365 = vmatpush2.bf16.msra.mxu0 0
        %366 = vmatprep.subr.bf16.mxu0 0
        %367 = vmatpush2.bf16.msra.mxu0 0
        %368 = vmatprep.subr.bf16.mxu0 0
        %369 = vmatpush2.bf16.msra.mxu0 0
        %370 = vmatprep.subr.bf16.mxu0 0
        %371 = vmatpush2.bf16.msra.mxu0 0
        %372 = vmatprep.subr.bf16.mxu0 0
        %373 = vmatpush2.bf16.msra.mxu0 0
        %374 = vmatprep.mubr.bf16.mxu0 0
        %375 = vmatmul.mubr.bf16.gmra.mxu0 %v336
        %v376 = vpop.f32.mrf.mxu0
        %v377 = vadd.f32 0.0, %v376
        %v378 = vpop.f32.mrf.mxu0
        %v379 = vpop.f32.mrf.mxu0
        %v380 = vpop.f32.mrf.mxu0
        %381 = vdwg.mxu0
        %v383 = vsel %vm334, %v313, 0
        %v386 = vsel %vm338, %v317, 0
        %388 = vmatprep.subr.bf16.mxu0 0
        %389 = vmatpush1.bf16.msra.mxu0 0
        %390 = vmatprep.subr.bf16.mxu0 0
        %391 = vmatpush1.bf16.msra.mxu0 0
        %392 = vmatprep.subr.bf16.mxu0 0
        %393 = vmatpush1.bf16.msra.mxu0 0
        %394 = vmatprep.subr.bf16.mxu0 0
        %395 = vmatpush1.bf16.msra.mxu0 0
        %396 = vmatprep.subr.bf16.mxu0 0
        %397 = vmatpush1.bf16.msra.mxu0 0
        %398 = vmatprep.subr.bf16.mxu0 0
        %399 = vmatpush1.bf16.msra.mxu0 0
        %400 = vmatprep.subr.bf16.mxu0 0
        %401 = vmatpush1.bf16.msra.mxu0 0
        %402 = vmatprep.subr.bf16.mxu0 0
        %403 = vmatpush1.bf16.msra.mxu0 %v386
        %404 = vmatprep.subr.bf16.mxu0 0
        %405 = vmatpush2.bf16.msra.mxu0 0
        %406 = vmatprep.subr.bf16.mxu0 0
        %407 = vmatpush2.bf16.msra.mxu0 0
        %408 = vmatprep.subr.bf16.mxu0 0
        %409 = vmatpush2.bf16.msra.mxu0 0
        %410 = vmatprep.subr.bf16.mxu0 0
        %411 = vmatpush2.bf16.msra.mxu0 0
        %412 = vmatprep.subr.bf16.mxu0 0
        %413 = vmatpush2.bf16.msra.mxu0 0
        %414 = vmatprep.subr.bf16.mxu0 0
        %415 = vmatpush2.bf16.msra.mxu0 0
        %416 = vmatprep.subr.bf16.mxu0 0
        %417 = vmatpush2.bf16.msra.mxu0 0
        %418 = vmatprep.subr.bf16.mxu0 0
        %419 = vmatpush2.bf16.msra.mxu0 0
        %420 = vmatprep.mubr.bf16.mxu0 0
        %421 = vmatmul.mubr.bf16.gmra.mxu0 %v383
        %v422 = vpop.f32.mrf.mxu0
        %v423 = vadd.f32 %v377, %v422
        %v424 = vpop.f32.mrf.mxu0
        %v425 = vpop.f32.mrf.mxu0
        %v426 = vpop.f32.mrf.mxu0
        %427 = vdwg.mxu0
        %v430 = vunpack.c.l.b16 %v313
        %v431 = vunpack.c.l.b16 %v314
        %v432 = vpack.c.b16 %v431, %v430
        %v434 = vshrl.u32 %v432, 16
        %v436 = vshll.u32 %v432, 16
        %v438 = vrot.slane %v436, 1
        %v439 = vor.u32 %v434, %v438
        %v441 = vsel %vm334, %v439, 0
        %v444 = vsel %vm338, %v319, 0
        %446 = vmatprep.subr.bf16.mxu0 0
        %447 = vmatpush1.bf16.msra.mxu0 0
        %448 = vmatprep.subr.bf16.mxu0 0
        %449 = vmatpush1.bf16.msra.mxu0 0
        %450 = vmatprep.subr.bf16.mxu0 0
        %451 = vmatpush1.bf16.msra.mxu0 0
        %452 = vmatprep.subr.bf16.mxu0 0
        %453 = vmatpush1.bf16.msra.mxu0 0
        %454 = vmatprep.subr.bf16.mxu0 0
        %455 = vmatpush1.bf16.msra.mxu0 0
        %456 = vmatprep.subr.bf16.mxu0 0
        %457 = vmatpush1.bf16.msra.mxu0 0
        %458 = vmatprep.subr.bf16.mxu0 0
        %459 = vmatpush1.bf16.msra.mxu0 0
        %460 = vmatprep.subr.bf16.mxu0 0
        %461 = vmatpush1.bf16.msra.mxu0 %v444
        %462 = vmatprep.subr.bf16.mxu0 0
        %463 = vmatpush2.bf16.msra.mxu0 0
        %464 = vmatprep.subr.bf16.mxu0 0
        %465 = vmatpush2.bf16.msra.mxu0 0
        %466 = vmatprep.subr.bf16.mxu0 0
        %467 = vmatpush2.bf16.msra.mxu0 0
        %468 = vmatprep.subr.bf16.mxu0 0
        %469 = vmatpush2.bf16.msra.mxu0 0
        %470 = vmatprep.subr.bf16.mxu0 0
        %471 = vmatpush2.bf16.msra.mxu0 0
        %472 = vmatprep.subr.bf16.mxu0 0
        %473 = vmatpush2.bf16.msra.mxu0 0
        %474 = vmatprep.subr.bf16.mxu0 0
        %475 = vmatpush2.bf16.msra.mxu0 0
        %476 = vmatprep.subr.bf16.mxu0 0
        %477 = vmatpush2.bf16.msra.mxu0 0
        %478 = vmatprep.mubr.bf16.mxu0 0
        %479 = vmatmul.mubr.bf16.gmra.mxu0 %v441
        %v480 = vpop.f32.mrf.mxu0
        %v481 = vadd.f32 0.0, %v480
        %v482 = vpop.f32.mrf.mxu0
        %v483 = vpop.f32.mrf.mxu0
        %v484 = vpop.f32.mrf.mxu0
        %485 = vdwg.mxu0
        %v486 = vadd.f32 %v423, %v481
        %v488 = vlaneseq
        %v489 = vshrl.u32 %v488, 7
        %v490 = vsub.s32 0, %v489
        %v491 = vrot.slane %v320, %v490
        %v493 = vadd.f32 %v486, %v491
        %v494 = vmul.f32 %v493, 0.5
        %v495 = vmul.f32 %v493, 0.044715
        %v496 = vmul.f32 %v495, %v493
        %v497 = vmul.f32 %v496, %v493
        %v498 = vadd.f32 %v493, %v497
        %v499 = vmul.f32 %v498, 0.7978846
        %v500 = vtanh.pop %v499
        %v501 = vadd.f32 %v500, 1.0
        %v502 = vmul.f32 %v494, %v501
        %503 = vmatprep.subr.bf16.mxu0 0
        %504 = vmatpush1.bf16.msra.mxu0 0
        %505 = vmatprep.subr.bf16.mxu0 0
        %506 = vmatpush1.bf16.msra.mxu0 0
        %507 = vmatprep.subr.bf16.mxu0 0
        %508 = vmatpush1.bf16.msra.mxu0 0
        %509 = vmatprep.subr.bf16.mxu0 0
        %510 = vmatpush1.bf16.msra.mxu0 0
        %511 = vmatprep.subr.bf16.mxu0 0
        %512 = vmatpush1.bf16.msra.mxu0 0
        %513 = vmatprep.subr.bf16.mxu0 0
        %514 = vmatpush1.bf16.msra.mxu0 0
        %515 = vmatprep.subr.bf16.mxu0 0
        %516 = vmatpush1.bf16.msra.mxu0 0
        %517 = vmatprep.subr.bf16.mxu0 0
        %518 = vmatpush1.bf16.msra.mxu0 %v340
        %519 = vmatprep.subr.bf16.mxu0 0
        %520 = vmatpush2.bf16.msra.mxu0 0
        %521 = vmatprep.subr.bf16.mxu0 0
        %522 = vmatpush2.bf16.msra.mxu0 0
        %523 = vmatprep.subr.bf16.mxu0 0
        %524 = vmatpush2.bf16.msra.mxu0 0
        %525 = vmatprep.subr.bf16.mxu0 0
        %526 = vmatpush2.bf16.msra.mxu0 0
        %527 = vmatprep.subr.bf16.mxu0 0
        %528 = vmatpush2.bf16.msra.mxu0 0
        %529 = vmatprep.subr.bf16.mxu0 0
        %530 = vmatpush2.bf16.msra.mxu0 0
        %531 = vmatprep.subr.bf16.mxu0 0
        %532 = vmatpush2.bf16.msra.mxu0 0
        %533 = vmatprep.subr.bf16.mxu0 0
        %534 = vmatpush2.bf16.msra.mxu0 0
        %535 = vmatprep.mubr.bf16.mxu0 0
        %536 = vmatmul.mubr.bf16.gmra.mxu0 %v441
        %v537 = vpop.f32.mrf.mxu0
        %v538 = vadd.f32 0.0, %v537
        %v539 = vpop.f32.mrf.mxu0
        %v540 = vpop.f32.mrf.mxu0
        %v541 = vpop.f32.mrf.mxu0
        %542 = vdwg.mxu0
        %543 = vmatprep.subr.bf16.mxu0 0
        %544 = vmatpush1.bf16.msra.mxu0 0
        %545 = vmatprep.subr.bf16.mxu0 0
        %546 = vmatpush1.bf16.msra.mxu0 0
        %547 = vmatprep.subr.bf16.mxu0 0
        %548 = vmatpush1.bf16.msra.mxu0 0
        %549 = vmatprep.subr.bf16.mxu0 0
        %550 = vmatpush1.bf16.msra.mxu0 0
        %551 = vmatprep.subr.bf16.mxu0 0
        %552 = vmatpush1.bf16.msra.mxu0 0
        %553 = vmatprep.subr.bf16.mxu0 0
        %554 = vmatpush1.bf16.msra.mxu0 0
        %555 = vmatprep.subr.bf16.mxu0 0
        %556 = vmatpush1.bf16.msra.mxu0 0
        %557 = vmatprep.subr.bf16.mxu0 0
        %558 = vmatpush1.bf16.msra.mxu0 %v386
        %559 = vmatprep.subr.bf16.mxu0 0
        %560 = vmatpush2.bf16.msra.mxu0 0
        %561 = vmatprep.subr.bf16.mxu0 0
        %562 = vmatpush2.bf16.msra.mxu0 0
        %563 = vmatprep.subr.bf16.mxu0 0
        %564 = vmatpush2.bf16.msra.mxu0 0
        %565 = vmatprep.subr.bf16.mxu0 0
        %566 = vmatpush2.bf16.msra.mxu0 0
        %567 = vmatprep.subr.bf16.mxu0 0
        %568 = vmatpush2.bf16.msra.mxu0 0
        %569 = vmatprep.subr.bf16.mxu0 0
        %570 = vmatpush2.bf16.msra.mxu0 0
        %571 = vmatprep.subr.bf16.mxu0 0
        %572 = vmatpush2.bf16.msra.mxu0 0
        %573 = vmatprep.subr.bf16.mxu0 0
        %574 = vmatpush2.bf16.msra.mxu0 0
        %575 = vmatprep.mubr.bf16.mxu0 0
        %576 = vmatmul.mubr.bf16.gmra.mxu0 %v336
        %v577 = vpop.f32.mrf.mxu0
        %v578 = vadd.f32 %v538, %v577
        %v579 = vpop.f32.mrf.mxu0
        %v580 = vpop.f32.mrf.mxu0
        %v581 = vpop.f32.mrf.mxu0
        %582 = vdwg.mxu0
        %v585 = vunpack.c.l.b16 %v315
        %v586 = vunpack.c.l.b16 %v316
        %v587 = vpack.c.b16 %v586, %v585
        %v589 = vshrl.u32 %v587, 16
        %v591 = vshll.u32 %v587, 16
        %v593 = vrot.slane %v591, 1
        %v594 = vor.u32 %v589, %v593
        %v596 = vsel %vm334, %v594, 0
        %598 = vmatprep.subr.bf16.mxu0 0
        %599 = vmatpush1.bf16.msra.mxu0 0
        %600 = vmatprep.subr.bf16.mxu0 0
        %601 = vmatpush1.bf16.msra.mxu0 0
        %602 = vmatprep.subr.bf16.mxu0 0
        %603 = vmatpush1.bf16.msra.mxu0 0
        %604 = vmatprep.subr.bf16.mxu0 0
        %605 = vmatpush1.bf16.msra.mxu0 0
        %606 = vmatprep.subr.bf16.mxu0 0
        %607 = vmatpush1.bf16.msra.mxu0 0
        %608 = vmatprep.subr.bf16.mxu0 0
        %609 = vmatpush1.bf16.msra.mxu0 0
        %610 = vmatprep.subr.bf16.mxu0 0
        %611 = vmatpush1.bf16.msra.mxu0 0
        %612 = vmatprep.subr.bf16.mxu0 0
        %613 = vmatpush1.bf16.msra.mxu0 %v444
        %614 = vmatprep.subr.bf16.mxu0 0
        %615 = vmatpush2.bf16.msra.mxu0 0
        %616 = vmatprep.subr.bf16.mxu0 0
        %617 = vmatpush2.bf16.msra.mxu0 0
        %618 = vmatprep.subr.bf16.mxu0 0
        %619 = vmatpush2.bf16.msra.mxu0 0
        %620 = vmatprep.subr.bf16.mxu0 0
        %621 = vmatpush2.bf16.msra.mxu0 0
        %622 = vmatprep.subr.bf16.mxu0 0
        %623 = vmatpush2.bf16.msra.mxu0 0
        %624 = vmatprep.subr.bf16.mxu0 0
        %625 = vmatpush2.bf16.msra.mxu0 0
        %626 = vmatprep.subr.bf16.mxu0 0
        %627 = vmatpush2.bf16.msra.mxu0 0
        %628 = vmatprep.subr.bf16.mxu0 0
        %629 = vmatpush2.bf16.msra.mxu0 0
        %630 = vmatprep.mubr.bf16.mxu0 0
        %631 = vmatmul.mubr.bf16.gmra.mxu0 %v596
        %v632 = vpop.f32.mrf.mxu0
        %v633 = vadd.f32 0.0, %v632
        %v634 = vpop.f32.mrf.mxu0
        %v635 = vpop.f32.mrf.mxu0
        %v636 = vpop.f32.mrf.mxu0
        %637 = vdwg.mxu0
        %v638 = vadd.f32 %v578, %v633
        %v639 = vadd.f32 %v638, %v491
        %v640 = vmul.f32 %v639, 0.5
        %v641 = vmul.f32 %v639, 0.044715
        %v642 = vmul.f32 %v641, %v639
        %v643 = vmul.f32 %v642, %v639
        %v644 = vadd.f32 %v639, %v643
        %v645 = vmul.f32 %v644, 0.7978846
        %v646 = vtanh.pop %v645
        %v647 = vadd.f32 %v646, 1.0
        %v648 = vmul.f32 %v640, %v647
        %v650 = vrot.slane %v648, 7
        %vm652 = vcmask 1040384
        %v653 = vsel %vm652, 0.0, %v650
        %v654 = vpack.c.bf16 %v653, %v653
        %v655 = vpack.c.bf16 %v502, %v502
        %v660 = vunpack.c.l.b16 %v325
        %v661 = vunpack.c.l.b16 %v326
        %v662 = vunpack.c.l.b16 %v327
        %v663 = vunpack.c.l.b16 %v328
        %v664 = vpack.c.b16 %v661, %v660
        %v665 = vpack.c.b16 %v663, %v662
        %vm668 = vcmask 261120
        %v670 = vsel %vm668, %v655, 0
        %672 = vmatprep.subr.bf16.mxu0 0
        %673 = vmatpush1.bf16.msra.mxu0 0
        %674 = vmatprep.subr.bf16.mxu0 0
        %675 = vmatpush1.bf16.msra.mxu0 0
        %676 = vmatprep.subr.bf16.mxu0 0
        %677 = vmatpush1.bf16.msra.mxu0 0
        %678 = vmatprep.subr.bf16.mxu0 0
        %679 = vmatpush1.bf16.msra.mxu0 0
        %680 = vmatprep.subr.bf16.mxu0 0
        %681 = vmatpush1.bf16.msra.mxu0 0
        %682 = vmatprep.subr.bf16.mxu0 0
        %683 = vmatpush1.bf16.msra.mxu0 0
        %684 = vmatprep.subr.bf16.mxu0 0
        %685 = vmatpush1.bf16.msra.mxu0 %v665
        %686 = vmatprep.subr.bf16.mxu0 0
        %687 = vmatpush1.bf16.msra.mxu0 %v664
        %688 = vmatprep.subr.bf16.mxu0 0
        %689 = vmatpush2.bf16.msra.mxu0 0
        %690 = vmatprep.subr.bf16.mxu0 0
        %691 = vmatpush2.bf16.msra.mxu0 0
        %692 = vmatprep.subr.bf16.mxu0 0
        %693 = vmatpush2.bf16.msra.mxu0 0
        %694 = vmatprep.subr.bf16.mxu0 0
        %695 = vmatpush2.bf16.msra.mxu0 0
        %696 = vmatprep.subr.bf16.mxu0 0
        %697 = vmatpush2.bf16.msra.mxu0 0
        %698 = vmatprep.subr.bf16.mxu0 0
        %699 = vmatpush2.bf16.msra.mxu0 0
        %700 = vmatprep.subr.bf16.mxu0 0
        %701 = vmatpush2.bf16.msra.mxu0 0
        %702 = vmatprep.subr.bf16.mxu0 0
        %703 = vmatpush2.bf16.msra.mxu0 0
        %704 = vmatprep.mubr.bf16.mxu0 0
        %705 = vmatmul.mubr.bf16.gmra.mxu0 %v670
        %v706 = vpop.f32.mrf.mxu0
        %v707 = vadd.f32 0.0, %v706
        %v708 = vpop.f32.mrf.mxu0
        %v709 = vpop.f32.mrf.mxu0
        %v710 = vpop.f32.mrf.mxu0
        %711 = vdwg.mxu0
        %v716 = vunpack.c.l.b16 %v321
        %v717 = vunpack.c.l.b16 %v322
        %v718 = vunpack.c.l.b16 %v323
        %v719 = vunpack.c.l.b16 %v324
        %v720 = vpack.c.b16 %v717, %v716
        %v721 = vpack.c.b16 %v719, %v718
        %v725 = vsel %vm668, %v654, 0
        %727 = vmatprep.subr.bf16.mxu0 0
        %728 = vmatpush1.bf16.msra.mxu0 0
        %729 = vmatprep.subr.bf16.mxu0 0
        %730 = vmatpush1.bf16.msra.mxu0 0
        %731 = vmatprep.subr.bf16.mxu0 0
        %732 = vmatpush1.bf16.msra.mxu0 0
        %733 = vmatprep.subr.bf16.mxu0 0
        %734 = vmatpush1.bf16.msra.mxu0 0
        %735 = vmatprep.subr.bf16.mxu0 0
        %736 = vmatpush1.bf16.msra.mxu0 0
        %737 = vmatprep.subr.bf16.mxu0 0
        %738 = vmatpush1.bf16.msra.mxu0 0
        %739 = vmatprep.subr.bf16.mxu0 0
        %740 = vmatpush1.bf16.msra.mxu0 %v721
        %741 = vmatprep.subr.bf16.mxu0 0
        %742 = vmatpush1.bf16.msra.mxu0 %v720
        %743 = vmatprep.subr.bf16.mxu0 0
        %744 = vmatpush2.bf16.msra.mxu0 0
        %745 = vmatprep.subr.bf16.mxu0 0
        %746 = vmatpush2.bf16.msra.mxu0 0
        %747 = vmatprep.subr.bf16.mxu0 0
        %748 = vmatpush2.bf16.msra.mxu0 0
        %749 = vmatprep.subr.bf16.mxu0 0
        %750 = vmatpush2.bf16.msra.mxu0 0
        %751 = vmatprep.subr.bf16.mxu0 0
        %752 = vmatpush2.bf16.msra.mxu0 0
        %753 = vmatprep.subr.bf16.mxu0 0
        %754 = vmatpush2.bf16.msra.mxu0 0
        %755 = vmatprep.subr.bf16.mxu0 0
        %756 = vmatpush2.bf16.msra.mxu0 0
        %757 = vmatprep.subr.bf16.mxu0 0
        %758 = vmatpush2.bf16.msra.mxu0 0
        %759 = vmatprep.mubr.bf16.mxu0 0
        %760 = vmatmul.mubr.bf16.gmra.mxu0 %v725
        %v761 = vpop.f32.mrf.mxu0
        %v762 = vadd.f32 %v707, %v761
        %v763 = vpop.f32.mrf.mxu0
        %v764 = vpop.f32.mrf.mxu0
        %v765 = vpop.f32.mrf.mxu0
        %766 = vdwg.mxu0
        %v767 = vpack.c.bf16 %v648, %v648
        %v772 = vunpack.c.l.b16 %v329
        %v773 = vunpack.c.l.b16 %v330
        %v774 = vunpack.c.l.b16 %v331
        %v775 = vunpack.c.l.b16 %v332
        %v776 = vpack.c.b16 %v773, %v772
        %v777 = vpack.c.b16 %v775, %v774
        %v781 = vsel %vm668, %v767, 0
        %783 = vmatprep.subr.bf16.mxu0 0
        %784 = vmatpush1.bf16.msra.mxu0 0
        %785 = vmatprep.subr.bf16.mxu0 0
        %786 = vmatpush1.bf16.msra.mxu0 0
        %787 = vmatprep.subr.bf16.mxu0 0
        %788 = vmatpush1.bf16.msra.mxu0 0
        %789 = vmatprep.subr.bf16.mxu0 0
        %790 = vmatpush1.bf16.msra.mxu0 0
        %791 = vmatprep.subr.bf16.mxu0 0
        %792 = vmatpush1.bf16.msra.mxu0 0
        %793 = vmatprep.subr.bf16.mxu0 0
        %794 = vmatpush1.bf16.msra.mxu0 0
        %795 = vmatprep.subr.bf16.mxu0 0
        %796 = vmatpush1.bf16.msra.mxu0 %v777
        %797 = vmatprep.subr.bf16.mxu0 0
        %798 = vmatpush1.bf16.msra.mxu0 %v776
        %799 = vmatprep.subr.bf16.mxu0 0
        %800 = vmatpush2.bf16.msra.mxu0 0
        %801 = vmatprep.subr.bf16.mxu0 0
        %802 = vmatpush2.bf16.msra.mxu0 0
        %803 = vmatprep.subr.bf16.mxu0 0
        %804 = vmatpush2.bf16.msra.mxu0 0
        %805 = vmatprep.subr.bf16.mxu0 0
        %806 = vmatpush2.bf16.msra.mxu0 0
        %807 = vmatprep.subr.bf16.mxu0 0
        %808 = vmatpush2.bf16.msra.mxu0 0
        %809 = vmatprep.subr.bf16.mxu0 0
        %810 = vmatpush2.bf16.msra.mxu0 0
        %811 = vmatprep.subr.bf16.mxu0 0
        %812 = vmatpush2.bf16.msra.mxu0 0
        %813 = vmatprep.subr.bf16.mxu0 0
        %814 = vmatpush2.bf16.msra.mxu0 0
        %815 = vmatprep.mubr.bf16.mxu0 0
        %816 = vmatmul.mubr.bf16.gmra.mxu0 %v781
        %v817 = vpop.f32.mrf.mxu0
        %v818 = vadd.f32 0.0, %v817
        %v819 = vpop.f32.mrf.mxu0
        %v820 = vpop.f32.mrf.mxu0
        %v821 = vpop.f32.mrf.mxu0
        %822 = vdwg.mxu0
        %v823 = vadd.f32 %v762, %v818
        %v825 = vlaneseq
        %v826 = vshrl.u32 %v825, 7
        %v827 = vsub.s32 0, %v826
        %v828 = vrot.slane %v333, %v827
        %v830 = vadd.f32 %v823, %v828
        %v831 = vmul.f32 %v830, 0.5
        %v832 = vmul.f32 %v830, 0.044715
        %v833 = vmul.f32 %v832, %v830
        %v834 = vmul.f32 %v833, %v830
        %v835 = vadd.f32 %v830, %v834
        %v836 = vmul.f32 %v835, 0.7978846
        %v837 = vtanh.pop %v836
        %v838 = vadd.f32 %v837, 1.0
        %v839 = vmul.f32 %v831, %v838
        %v840 = vld [vmem:[%s2] sm:$0xff]
        %v841 = vadd.f32 %v839, %v840
        %842 = vst.msk [vmem:[%s301] sm:$0xff] %vm668, %v841
        %s843 = sand.u32 %s187, 1
        %s844 = scalar_lea.sflag [#allocation4], %s843
        %s845 = sand.u32 %s187, 1
        %s846 = smul.addr %s845, 8
        %s847 = scalar_lea.vmem [#allocation5], %s846
        // Predicated region
        $region53: #{tpu_custom_call.1} parent=47 // pred_check
          %p848 = pneg %p197
        $region54: #{tpu_custom_call.1} parent=47 // pred_check_branch
          %850 = sbr.rel (%p848) target = $region56
        $region55: #{tpu_custom_call.1} parent=47 // pred_region
          %s852 = ssub.s32 128, 128
          %853 = vsyncadd %s844, %s852
          %s854 = smul.addr %s22, 128
          %s855 = scalar_lea.hbm %s7, %s854
          %s857 = sshll.u32 %s847, 4
          %s858 = int_to_ptr.vmem [resolvable:$true] %s857
          %860 = dma.vmem_to_hbm [thread:$0]  %s858, 128, %s855, %s844
        $region56: #{tpu_custom_call.1} parent=47 // pred_fallthru
          _
      $region48: #{tpu_custom_call.1} parent=5 // pred_fallthru
        _
      %p861 = scmp.le.s32.totalorder 2, %s17
      // Predicated region
      $region57: #{tpu_custom_call.1} parent=5 // pred_check
        %p862 = pneg %p861
      $region58: #{tpu_custom_call.1} parent=5 // pred_check_branch
        %864 = sbr.rel (%p862) target = $region60
      $region59: #{tpu_custom_call.1} parent=5 // pred_region
        %s865 = ssub.s32 %s17, 2
        // Predicated region
        $region61: #{tpu_custom_call.1} parent=59 // pred_check
          %p866 = pneg %p203
        $region62: #{tpu_custom_call.1} parent=59 // pred_check_branch
          %868 = sbr.rel (%p866) target = $region64
        $region63: #{tpu_custom_call.1} parent=59 // pred_region
          %s869 = sand.u32 %s188, 1
          %s870 = scalar_lea.sflag [#allocation4], %s869
          %s871 = sand.u32 %s188, 1
          %s872 = smul.addr %s871, 8
          %s873 = scalar_lea.vmem [#allocation5], %s872
          %874 = dma.done %s870, 128
        $region64: #{tpu_custom_call.1} parent=59 // pred_fallthru
          _
      $region60: #{tpu_custom_call.1} parent=5 // pred_fallthru
        _
    $region6: #{tpu_custom_call.1} parent=1 // loop_footer
      %s21 = sadd.s32 1, %s17
    $region7: #{tpu_custom_call.1} parent=1 // loop_footer_branch
      %16 = sbr.rel target = $region3
    $region8: #{tpu_custom_call.1} parent=1 // loop_exit
      _
    %875 = vsyncpa [#allocation3], 1
    %s876 = scalar_lea.sflag [#allocation3], 1
    %877 = vsyncpa %s876, 1
    %878 = vsyncpa [#allocation4], 1
    %s879 = scalar_lea.sflag [#allocation4], 1
    %880 = vsyncpa %s879, 1

</llo_original>
